<compile_context>
chip_gen: v6e
topology: v6e:2x2x1
jax: 0.10.0
libtpu: 0.0.40
codegen_flags: <defaults>
</compile_context>

<pallas_src>
import jax
import jax.numpy as jnp
from jax.experimental import pallas as pl
from jax.experimental.pallas import tpu as pltpu


def encoder_kernel(idx_ref, emb_ref, w1_ref, b1_ref, w2_ref, b2_ref,
                   adjblk_ref, wa_ref, alpha_ref,
                   x_ref, prob_ref, alpha_out_ref):
    # idx_ref   : (B*D, 1) int32   -- embedding indices (batch merged into rows)
    # emb_ref   : (O, H)           -- embedding table
    # w1_ref    : (H, H), b1_ref : (1, H)
    # w2_ref    : (H, O), b2_ref : (1, O)
    # adjblk_ref: (B*D, B*D)       -- block-diag of (I - sinh(3A)^T), one block/batch
    # wa_ref    : (1, 1)
    # alpha_ref : (D, O)
    BD = idx_ref.shape[0]
    O = emb_ref.shape[0]

    # Embedding lookup as one-hot @ table (single MXU matmul over all batches).
    idx = idx_ref[...]                                               # (BD, 1)
    cols = jax.lax.broadcasted_iota(jnp.int32, (BD, O), 1)           # (BD, O)
    onehot = (idx == cols).astype(jnp.float32)                       # (BD, O)
    emb = jnp.dot(onehot, emb_ref[...],
                  preferred_element_type=jnp.float32)                # (BD, H)

    # fc1 + relu, fc2 — batch merged into M.
    h1 = jnp.maximum(
        jnp.dot(emb, w1_ref[...], preferred_element_type=jnp.float32)
        + b1_ref[...], 0.0)                                          # (BD, H)
    x = (jnp.dot(h1, w2_ref[...], preferred_element_type=jnp.float32)
         + b2_ref[...])                                              # (BD, O)
    x_ref[...] = x

    # logits = adj_Aforz @ (x_b + Wa) - Wa, all batches at once via the
    # block-diagonal adjacency, with Wa folded into a per-row correction:
    #   adj @ (x + Wa) - Wa = adj @ x + Wa * (rowsum(adj) - 1)
    adjblk = adjblk_ref[...]                                         # (BD, BD)
    corr = wa_ref[...] * (jnp.sum(adjblk, axis=1, keepdims=True) - 1.0)
    logits = jnp.dot(adjblk, x, preferred_element_type=jnp.float32) + corr

    # softmax over the feature axis (my_softmax(logits, -1))
    m = jnp.max(logits, axis=-1, keepdims=True)
    e = jnp.exp(logits - m)
    prob_ref[...] = e / jnp.sum(e, axis=-1, keepdims=True)

    # alpha softmax (parameter-only, my_softmax(alpha, -1))
    a = alpha_ref[...]
    am = jnp.max(a, axis=-1, keepdims=True)
    ae = jnp.exp(a - am)
    alpha_out_ref[...] = ae / jnp.sum(ae, axis=-1, keepdims=True)


def mlpd_encoder_forward(inputs, adj_A, Wa, embed_w, W1, b1, W2, b2,
                         alpha, z, z_positive):
    """Pallas implementation of MLPDEncoder.forward.

    inputs  : (B, D, 1) integer class indices
    adj_A   : (D, D)   learned adjacency parameter
    Wa      : scalar
    embed_w : (n_out, n_hid) embedding table
    W1, b1  : fc1 as (n_hid, n_hid), (n_hid,)      [x @ W + b layout]
    W2, b2  : fc2 as (n_hid, n_out), (n_out,)
    alpha   : (D, n_out)
    """
    B, D = inputs.shape[0], inputs.shape[1]
    O, H = embed_w.shape

    # --- tiny parameter preprocessing (plain-JAX glue) ---
    adj_A1 = jnp.sinh(3.0 * adj_A.astype(jnp.float32))               # sinh(3A)
    adj_forz = jnp.eye(D, dtype=jnp.float32) - adj_A1.T              # I - A1^T
    adj_eye = jnp.eye(D, dtype=jnp.float32)
    # batch merged into matmul rows -> block-diagonal adjacency (B*D, B*D)
    adj_block = jnp.kron(jnp.eye(B, dtype=jnp.float32), adj_forz)

    idx = inputs.reshape(B * D, 1).astype(jnp.int32)
    wa2 = jnp.reshape(Wa, (1, 1)).astype(jnp.float32)
    b1_2 = b1.reshape(1, H).astype(jnp.float32)
    b2_2 = b2.reshape(1, O).astype(jnp.float32)

    vmem = pl.BlockSpec(memory_space=pltpu.MemorySpace.VMEM)
    x_flat, prob_flat, alpha_sm = pl.pallas_call(
        encoder_kernel,
        out_shape=(
            jax.ShapeDtypeStruct((B * D, O), jnp.float32),
            jax.ShapeDtypeStruct((B * D, O), jnp.float32),
            jax.ShapeDtypeStruct((D, O), jnp.float32),
        ),
        in_specs=[vmem] * 9,
        out_specs=(vmem, vmem, vmem),
    )(idx, embed_w.astype(jnp.float32), W1.astype(jnp.float32), b1_2,
      W2.astype(jnp.float32), b2_2, adj_block, wa2,
      alpha.astype(jnp.float32))

    x = x_flat.reshape(B, D, O)
    prob = prob_flat.reshape(B, D, O)
    return (x, prob, adj_A1, adj_eye, z, z_positive, adj_A, Wa, alpha_sm)


def xavier_normal(key, fan_in, fan_out):
    std = (2.0 / (fan_in + fan_out)) ** 0.5
    return std * jax.random.normal(key, (fan_in, fan_out), dtype=jnp.float32)


if __name__ == "__main__":
    # Small shapes consistent with the module.
    B = 2      # batch_size
    D = 8      # n_var (adj_A is D x D)
    H = 32     # n_hid
    O = 16     # n_out (embedding vocabulary and fc2 output size)

    key = jax.random.PRNGKey(0)
    (k_in, k_A, k_wa, k_emb, k_w1, k_b1, k_w2, k_b2, k_al) = jax.random.split(key, 9)

    inputs = jax.random.randint(k_in, (B, D, 1), 0, O)                # int indices
    adj_A = 0.1 * jax.random.normal(k_A, (D, D), dtype=jnp.float32)
    Wa = 0.1 * jax.random.normal(k_wa, (), dtype=jnp.float32)
    embed_w = xavier_normal(k_emb, O, H)                              # embedding table
    W1 = xavier_normal(k_w1, H, H)                                    # fc1.weight^T
    b1 = 0.01 * jax.random.normal(k_b1, (H,), dtype=jnp.float32)
    W2 = xavier_normal(k_w2, H, O)                                    # fc2.weight^T
    b2 = 0.01 * jax.random.normal(k_b2, (O,), dtype=jnp.float32)
    alpha = 0.5 * jax.random.normal(k_al, (D, O), dtype=jnp.float32)
    z = jnp.float32(0.1)
    z_positive = jnp.ones((D, D), dtype=jnp.float32)

    outs = mlpd_encoder_forward(inputs, adj_A, Wa, embed_w, W1, b1, W2, b2,
                                alpha, z, z_positive)
    jax.block_until_ready(outs)
    (x, prob, adj_A1_out, adj_eye_out, z_out, zp_out, adjA_out, Wa_out,
     alpha_sm) = outs

    # --- pure-JAX reference check ---
    hp = jax.lax.Precision.HIGHEST
    adj_A1_ref = jnp.sinh(3.0 * adj_A)
    adj_forz_ref = jnp.eye(D, dtype=jnp.float32) - adj_A1_ref.T
    emb_ref = embed_w[inputs[..., 0]]                                 # (B, D, H)
    h1_ref = jax.nn.relu(jnp.einsum("bdh,hk->bdk", emb_ref, W1, precision=hp) + b1)
    x_ref = jnp.einsum("bdk,ko->bdo", h1_ref, W2, precision=hp) + b2
    logits_ref = jnp.einsum("ij,bjo->bio", adj_forz_ref, x_ref + Wa,
                            precision=hp) - Wa
    prob_ref = jax.nn.softmax(logits_ref, axis=-1)
    alpha_sm_ref = jax.nn.softmax(alpha, axis=-1)

    assert jnp.allclose(x, x_ref, atol=1e-4, rtol=1e-4)
    assert jnp.allclose(prob, prob_ref, atol=1e-4, rtol=1e-4)
    assert jnp.allclose(alpha_sm, alpha_sm_ref, atol=1e-4, rtol=1e-4)
    assert jnp.allclose(adj_A1_out, adj_A1_ref, atol=1e-6, rtol=1e-6)
    assert jnp.allclose(adj_eye_out, jnp.eye(D, dtype=jnp.float32))
    assert jnp.allclose(zp_out, z_positive)

    print("KERNEL_OK")
</pallas_src>

<mosaic_0001>
module attributes {stable_mosaic.version = 11 : i64} {
  func.func @encoder_kernel(%arg0: memref<16x1xi32, #tpu.memory_space<vmem>>, %arg1: memref<16x32xf32, #tpu.memory_space<vmem>>, %arg2: memref<32x32xf32, #tpu.memory_space<vmem>>, %arg3: memref<1x32xf32, #tpu.memory_space<vmem>>, %arg4: memref<32x16xf32, #tpu.memory_space<vmem>>, %arg5: memref<1x16xf32, #tpu.memory_space<vmem>>, %arg6: memref<16x16xf32, #tpu.memory_space<vmem>>, %arg7: memref<1x1xf32, #tpu.memory_space<vmem>>, %arg8: memref<8x16xf32, #tpu.memory_space<vmem>>, %arg9: memref<16x16xf32, #tpu.memory_space<vmem>>, %arg10: memref<16x16xf32, #tpu.memory_space<vmem>>, %arg11: memref<8x16xf32, #tpu.memory_space<vmem>>) attributes {dimension_semantics = [], scalar_prefetch = 0 : i64, scratch_operands = 0 : i64, tpu.core_type = #tpu.core_type<tc>} {
    %c0 = arith.constant 0 : index
    %c0_0 = arith.constant 0 : index
    %0 = vector.load %arg0[%c0, %c0_0] : memref<16x1xi32, #tpu.memory_space<vmem>>, vector<16x1xi32>
    %1 = tpu.iota {dimensions = array<i32: 1>} : vector<16x16xi32>
    %2 = vector.broadcast %0 : vector<16x1xi32> to vector<16x16xi32>
    %3 = arith.cmpi eq, %2, %1 : vector<16x16xi32>
    %4 = arith.extui %3 : vector<16x16xi1> to vector<16x16xi32>
    %5 = arith.sitofp %4 : vector<16x16xi32> to vector<16x16xf32>
    %c0_1 = arith.constant 0 : index
    %c0_2 = arith.constant 0 : index
    %6 = vector.load %arg1[%c0_1, %c0_2] : memref<16x32xf32, #tpu.memory_space<vmem>>, vector<16x32xf32>
    %cst = arith.constant dense<0.000000e+00> : vector<16x32xf32>
    %7 = tpu.matmul %5, %6, %cst {dimension_numbers = #tpu.dot_dimension_numbers<[1], [0], [0], [1], [0, 0, 1, 1], [], []>} : vector<16x16xf32>, vector<16x32xf32>, vector<16x32xf32> -> vector<16x32xf32>
    %c0_3 = arith.constant 0 : index
    %c0_4 = arith.constant 0 : index
    %8 = vector.load %arg2[%c0_3, %c0_4] : memref<32x32xf32, #tpu.memory_space<vmem>>, vector<32x32xf32>
    %cst_5 = arith.constant dense<0.000000e+00> : vector<16x32xf32>
    %9 = tpu.matmul %7, %8, %cst_5 {dimension_numbers = #tpu.dot_dimension_numbers<[1], [0], [0], [1], [0, 0, 1, 1], [], []>} : vector<16x32xf32>, vector<32x32xf32>, vector<16x32xf32> -> vector<16x32xf32>
    %c0_6 = arith.constant 0 : index
    %c0_7 = arith.constant 0 : index
    %10 = vector.load %arg3[%c0_6, %c0_7] : memref<1x32xf32, #tpu.memory_space<vmem>>, vector<1x32xf32>
    %11 = vector.broadcast %10 : vector<1x32xf32> to vector<16x32xf32>
    %12 = arith.addf %9, %11 : vector<16x32xf32>
    %cst_8 = arith.constant 0.000000e+00 : f32
    %13 = vector.broadcast %cst_8 : f32 to vector<16x32xf32>
    %14 = arith.maximumf %12, %13 : vector<16x32xf32>
    %c0_9 = arith.constant 0 : index
    %c0_10 = arith.constant 0 : index
    %15 = vector.load %arg4[%c0_9, %c0_10] : memref<32x16xf32, #tpu.memory_space<vmem>>, vector<32x16xf32>
    %cst_11 = arith.constant dense<0.000000e+00> : vector<16x16xf32>
    %16 = tpu.matmul %14, %15, %cst_11 {dimension_numbers = #tpu.dot_dimension_numbers<[1], [0], [0], [1], [0, 0, 1, 1], [], []>} : vector<16x32xf32>, vector<32x16xf32>, vector<16x16xf32> -> vector<16x16xf32>
    %c0_12 = arith.constant 0 : index
    %c0_13 = arith.constant 0 : index
    %17 = vector.load %arg5[%c0_12, %c0_13] : memref<1x16xf32, #tpu.memory_space<vmem>>, vector<1x16xf32>
    %18 = vector.broadcast %17 : vector<1x16xf32> to vector<16x16xf32>
    %19 = arith.addf %16, %18 : vector<16x16xf32>
    %c0_14 = arith.constant 0 : index
    %c0_15 = arith.constant 0 : index
    %20 = vector.load %arg9[%c0_14, %c0_15] : memref<16x16xf32, #tpu.memory_space<vmem>>, vector<16x16xf32>
    tpu.vector_store %arg9[%c0_14, %c0_15], %19 {strides = array<i32>} : memref<16x16xf32, #tpu.memory_space<vmem>>, vector<16x16xf32>,
    %c0_16 = arith.constant 0 : index
    %c0_17 = arith.constant 0 : index
    %21 = vector.load %arg6[%c0_16, %c0_17] : memref<16x16xf32, #tpu.memory_space<vmem>>, vector<16x16xf32>
    %c0_18 = arith.constant 0 : index
    %c0_19 = arith.constant 0 : index
    %22 = vector.load %arg7[%c0_18, %c0_19] : memref<1x1xf32, #tpu.memory_space<vmem>>, vector<1x1xf32>
    %cst_20 = arith.constant dense<0.000000e+00> : vector<16xf32>
    %23 = vector.multi_reduction <add>, %21, %cst_20 [1] : vector<16x16xf32> to vector<16xf32>
    %24 = vector.shape_cast %23 : vector<16xf32> to vector<16x1xf32>
    %cst_21 = arith.constant 1.000000e+00 : f32
    %25 = vector.broadcast %cst_21 : f32 to vector<16x1xf32>
    %26 = arith.subf %24, %25 : vector<16x1xf32>
    %27 = vector.broadcast %22 : vector<1x1xf32> to vector<16x1xf32>
    %28 = arith.mulf %27, %26 : vector<16x1xf32>
    %cst_22 = arith.constant dense<0.000000e+00> : vector<16x16xf32>
    %29 = tpu.matmul %21, %19, %cst_22 {dimension_numbers = #tpu.dot_dimension_numbers<[1], [0], [0], [1], [0, 0, 1, 1], [], []>} : vector<16x16xf32>, vector<16x16xf32>, vector<16x16xf32> -> vector<16x16xf32>
    %30 = vector.broadcast %28 : vector<16x1xf32> to vector<16x16xf32>
    %31 = arith.addf %29, %30 : vector<16x16xf32>
    %cst_23 = arith.constant dense<0xFF800000> : vector<16xf32>
    %32 = vector.multi_reduction <maximumf>, %31, %cst_23 [1] : vector<16x16xf32> to vector<16xf32>
    %33 = vector.shape_cast %32 : vector<16xf32> to vector<16x1xf32>
    %34 = vector.broadcast %33 : vector<16x1xf32> to vector<16x16xf32>
    %35 = arith.subf %31, %34 : vector<16x16xf32>
    %36 = math.exp %35 : vector<16x16xf32>
    %cst_24 = arith.constant dense<0.000000e+00> : vector<16xf32>
    %37 = vector.multi_reduction <add>, %36, %cst_24 [1] : vector<16x16xf32> to vector<16xf32>
    %38 = vector.shape_cast %37 : vector<16xf32> to vector<16x1xf32>
    %39 = vector.broadcast %38 : vector<16x1xf32> to vector<16x16xf32>
    %40 = arith.divf %36, %39 : vector<16x16xf32>
    %c0_25 = arith.constant 0 : index
    %c0_26 = arith.constant 0 : index
    %41 = vector.load %arg10[%c0_25, %c0_26] : memref<16x16xf32, #tpu.memory_space<vmem>>, vector<16x16xf32>
    tpu.vector_store %arg10[%c0_25, %c0_26], %40 {strides = array<i32>} : memref<16x16xf32, #tpu.memory_space<vmem>>, vector<16x16xf32>,
    %c0_27 = arith.constant 0 : index
    %c0_28 = arith.constant 0 : index
    %42 = vector.load %arg8[%c0_27, %c0_28] : memref<8x16xf32, #tpu.memory_space<vmem>>, vector<8x16xf32>
    %cst_29 = arith.constant dense<0xFF800000> : vector<8xf32>
    %43 = vector.multi_reduction <maximumf>, %42, %cst_29 [1] : vector<8x16xf32> to vector<8xf32>
    %44 = vector.shape_cast %43 : vector<8xf32> to vector<8x1xf32>
    %45 = vector.broadcast %44 : vector<8x1xf32> to vector<8x16xf32>
    %46 = arith.subf %42, %45 : vector<8x16xf32>
    %47 = math.exp %46 : vector<8x16xf32>
    %cst_30 = arith.constant dense<0.000000e+00> : vector<8xf32>
    %48 = vector.multi_reduction <add>, %47, %cst_30 [1] : vector<8x16xf32> to vector<8xf32>
    %49 = vector.shape_cast %48 : vector<8xf32> to vector<8x1xf32>
    %50 = vector.broadcast %49 : vector<8x1xf32> to vector<8x16xf32>
    %51 = arith.divf %47, %50 : vector<8x16xf32>
    %c0_31 = arith.constant 0 : index
    %c0_32 = arith.constant 0 : index
    %52 = vector.load %arg11[%c0_31, %c0_32] : memref<8x16xf32, #tpu.memory_space<vmem>>, vector<8x16xf32>
    tpu.vector_store %arg11[%c0_31, %c0_32], %51 {strides = array<i32>} : memref<8x16xf32, #tpu.memory_space<vmem>>, vector<8x16xf32>,
    return
  }
}

</mosaic_0001>

<llo_original>
// kernel: tpu_custom_call.1
$region0: #{tpu_custom_call.1}
  #allocation0 [shape = 'u32[]', space=smem, size = 0x4, offset = 0x4, fixed_abs, tag = 'smem constant byte address 0x4 - core index']
  #allocation1 [shape = 'u32[144,128]{1,0:T(1,128)}', space=vmem, size = 0x12000, scoped, tag = 'internal scratch']
  #allocation2 [shape = 'f32[1,1]{1,0:T(1,128)S(1)}', space=vmem, size = 0x200, scoped, tag = 'scoped memory for tpu_custom_call.1']
  %s0 = inlined_call_operand.vmem [shape: s32[16,1], index: 0, kind: input, shape index: {}]
  %s1 = inlined_call_operand.vmem [shape: f32[16,32], index: 1, kind: input, shape index: {}]
  %s2 = inlined_call_operand.vmem [shape: f32[32,32], index: 2, kind: input, shape index: {}]
  %s3 = inlined_call_operand.vmem [shape: f32[1,32], index: 3, kind: input, shape index: {}]
  %s4 = inlined_call_operand.vmem [shape: f32[32,16], index: 4, kind: input, shape index: {}]
  %s5 = inlined_call_operand.vmem [shape: f32[1,16], index: 5, kind: input, shape index: {}]
  %s6 = inlined_call_operand.hbm [shape: f32[16,16], index: 6, kind: input, shape index: {}]
  %s7 = inlined_call_operand.<no memory space> [shape: f32[1,1], index: 7, kind: input, shape index: {}]
  %s8 = inlined_call_operand.vmem [shape: f32[8,16], index: 8, kind: input, shape index: {}]
  %s9 = inlined_call_operand.hbm [shape: f32[16,16], index: 9, kind: output, shape index: {0}]
  %s10 = inlined_call_operand.hbm [shape: f32[16,16], index: 10, kind: output, shape index: {1}]
  %s11 = inlined_call_operand.hbm [shape: f32[8,16], index: 11, kind: output, shape index: {2}]
  %12 = xla_tuple %s9, %s10, %s11
  %s13 = sld [smem:[#allocation0]]
  $region66: #{tpu_custom_call.1} parent=0
    _
  %s15 = ssub.s32 1, %s13
  %s16 = scalar_select 0, %s15, %s13
  %v17 = vstv %s7
  %18 = vst [vmem:[#allocation2] sm:$0x1] %v17
  $region1: #{tpu_custom_call.1} parent=0
    #allocation3 [shape = 'u8[8192]{0}', space=vmem, size = 0x2000, scoped, tag = 'input window, operand 6, single buffered']
    #allocation4 [shape = 's32[1]{0}', space=sflag, size = 0x4, scoped, tag = 'scoped memory for tpu_custom_call.1']
    #allocation5 [shape = 's32[1]{0}', space=sflag, size = 0x4, scoped, tag = 'scoped memory for tpu_custom_call.1']
    #allocation6 [shape = 'u8[8192]{0}', space=vmem, size = 0x2000, scoped, tag = 'output window, operand 0, single buffered']
    #allocation7 [shape = 'u8[8192]{0}', space=vmem, size = 0x2000, scoped, tag = 'output window, operand 1, single buffered']
    #allocation8 [shape = 's32[1]{0}', space=sflag, size = 0x4, scoped, tag = 'scoped memory for tpu_custom_call.1']
    #allocation9 [shape = 'u8[4096]{0}', space=vmem, size = 0x1000, scoped, tag = 'output window, operand 2, single buffered']
    %19 = vsyncpa [#allocation4], 0
    %20 = vsyncpa [#allocation5], 0
    %21 = vsyncpa [#allocation8], 0
    // Predicated region
    $region2: #{tpu_custom_call.1} parent=1 // pred_check
      _
    $region3: #{tpu_custom_call.1} parent=1 // pred_check_branch
      %23 = sbr.rel (0) target = $region5
    $region4: #{tpu_custom_call.1} parent=1 // pred_region
      _
    $region5: #{tpu_custom_call.1} parent=1 // pred_fallthru
      _
    // Predicated region
    $region6: #{tpu_custom_call.1} parent=1 // pred_check
      _
    $region7: #{tpu_custom_call.1} parent=1 // pred_check_branch
      %25 = sbr.rel (0) target = $region9
    $region8: #{tpu_custom_call.1} parent=1 // pred_region
      _
    $region9: #{tpu_custom_call.1} parent=1 // pred_fallthru
      _
    // Predicated region
    $region10: #{tpu_custom_call.1} parent=1 // pred_check
      _
    $region11: #{tpu_custom_call.1} parent=1 // pred_check_branch
      %27 = sbr.rel (0) target = $region13
    $region12: #{tpu_custom_call.1} parent=1 // pred_region
      _
    $region13: #{tpu_custom_call.1} parent=1 // pred_fallthru
      _
    // Predicated region
    $region14: #{tpu_custom_call.1} parent=1 // pred_check
      _
    $region15: #{tpu_custom_call.1} parent=1 // pred_check_branch
      %29 = sbr.rel (0) target = $region17
    $region16: #{tpu_custom_call.1} parent=1 // pred_region
      _
    $region17: #{tpu_custom_call.1} parent=1 // pred_fallthru
      _
    // Predicated region
    $region18: #{tpu_custom_call.1} parent=1 // pred_check
      _
    $region19: #{tpu_custom_call.1} parent=1 // pred_check_branch
      %31 = sbr.rel (0) target = $region21
    $region20: #{tpu_custom_call.1} parent=1 // pred_region
      _
    $region21: #{tpu_custom_call.1} parent=1 // pred_fallthru
      _
    // Predicated region
    $region22: #{tpu_custom_call.1} parent=1 // pred_check
      _
    $region23: #{tpu_custom_call.1} parent=1 // pred_check_branch
      %33 = sbr.rel (0) target = $region25
    $region24: #{tpu_custom_call.1} parent=1 // pred_region
      _
    $region25: #{tpu_custom_call.1} parent=1 // pred_fallthru
      _
    // Predicated region
    $region26: #{tpu_custom_call.1} parent=1 // pred_check
      _
    $region27: #{tpu_custom_call.1} parent=1 // pred_check_branch
      %35 = sbr.rel (0) target = $region29
    $region28: #{tpu_custom_call.1} parent=1 // pred_region
      %s37 = ssub.s32 256, 256
      %38 = vsyncadd [#allocation4], %s37
      %s39 = sshll.u32 [#allocation3], 4
      %s40 = int_to_ptr.vmem [resolvable:$true] %s39
      %45 = dma.hbm_to_vmem [thread:$0]  %s6, 256, %s40, [#allocation4], 128, 128, 8
    $region29: #{tpu_custom_call.1} parent=1 // pred_fallthru
      _
    // Predicated region
    $region30: #{tpu_custom_call.1} parent=1 // pred_check
      _
    $region31: #{tpu_custom_call.1} parent=1 // pred_check_branch
      %47 = sbr.rel (0) target = $region33
    $region32: #{tpu_custom_call.1} parent=1 // pred_region
      _
    $region33: #{tpu_custom_call.1} parent=1 // pred_fallthru
      _
    // Predicated region
    $region34: #{tpu_custom_call.1} parent=1 // pred_check
      _
    $region35: #{tpu_custom_call.1} parent=1 // pred_check_branch
      %49 = sbr.rel (0) target = $region37
    $region36: #{tpu_custom_call.1} parent=1 // pred_region
      _
    $region37: #{tpu_custom_call.1} parent=1 // pred_fallthru
      _
    // Predicated region
    $region38: #{tpu_custom_call.1} parent=1 // pred_check
      _
    $region39: #{tpu_custom_call.1} parent=1 // pred_check_branch
      %51 = sbr.rel (0) target = $region41
    $region40: #{tpu_custom_call.1} parent=1 // pred_region
      %52 = dma.done [#allocation4], 256
    $region41: #{tpu_custom_call.1} parent=1 // pred_fallthru
      _
    %v53 = vld [vmem:[%s0] sm:$0xff]
    %v54 = vld [vmem:[%s0 + $0x8] sm:$0xff]
    %v55 = vlaneseq
    %v56 = vand.u32 %v55, 127
    %57 = vset.pattern.permute.xlu0 0
    %58 = vperm.xlu0 %57, %v53
    %v59 = vpop.permute.xlu0 %58
    %60 = vset.pattern.permute.xlu0 0
    %61 = vperm.xlu0 %60, %v54
    %v62 = vpop.permute.xlu0 %61
    %vm63 = vcmp.eq.s32.totalorder %v59, %v56
    %vm64 = vcmp.eq.s32.totalorder %v62, %v56
    %v65 = vsel %vm63, 1, 0
    %v66 = vsel %vm64, 1, 0
    %v67 = vcvt.s32.f32 %v65
    %v68 = vcvt.s32.f32 %v66
    %v69 = vld [vmem:[%s1] sm:$0xff]
    %v70 = vld [vmem:[%s1 + $0x8] sm:$0xff]
    %vm71 = vcmask 130048
    %v73 = vsel %vm71, %v67, 0
    %v76 = vsel %vm71, %v68, 0
    %78 = vmatprep.subr.mxu0 0.0
    %79 = vmatpush1.msra.mxu0 0.0
    %80 = vmatprep.subr.mxu0 0.0
    %81 = vmatpush1.msra.mxu0 0.0
    %82 = vmatprep.subr.mxu0 0.0
    %83 = vmatpush1.msra.mxu0 0.0
    %84 = vmatprep.subr.mxu0 0.0
    %85 = vmatpush1.msra.mxu0 0.0
    %86 = vmatprep.subr.mxu0 0.0
    %87 = vmatpush1.msra.mxu0 0.0
    %88 = vmatprep.subr.mxu0 0.0
    %89 = vmatpush1.msra.mxu0 0.0
    %90 = vmatprep.subr.mxu0 0.0
    %91 = vmatpush1.msra.mxu0 0.0
    %92 = vmatprep.subr.mxu0 0.0
    %93 = vmatpush1.msra.mxu0 0.0
    %94 = vmatprep.subr.mxu0 0.0
    %95 = vmatpush1.msra.mxu0 0.0
    %96 = vmatprep.subr.mxu0 0.0
    %97 = vmatpush1.msra.mxu0 0.0
    %98 = vmatprep.subr.mxu0 0.0
    %99 = vmatpush1.msra.mxu0 0.0
    %100 = vmatprep.subr.mxu0 0.0
    %101 = vmatpush1.msra.mxu0 0.0
    %102 = vmatprep.subr.mxu0 0.0
    %103 = vmatpush1.msra.mxu0 0.0
    %104 = vmatprep.subr.mxu0 0.0
    %105 = vmatpush1.msra.mxu0 0.0
    %106 = vmatprep.subr.mxu0 0.0
    %107 = vmatpush1.msra.mxu0 %v70
    %108 = vmatprep.subr.mxu0 0.0
    %109 = vmatpush1.msra.mxu0 %v69
    %110 = vmatprep.subr.mxu0 0.0
    %111 = vmatpush2.msra.mxu0 0.0
    %112 = vmatprep.subr.mxu0 0.0
    %113 = vmatpush2.msra.mxu0 0.0
    %114 = vmatprep.subr.mxu0 0.0
    %115 = vmatpush2.msra.mxu0 0.0
    %116 = vmatprep.subr.mxu0 0.0
    %117 = vmatpush2.msra.mxu0 0.0
    %118 = vmatprep.subr.mxu0 0.0
    %119 = vmatpush2.msra.mxu0 0.0
    %120 = vmatprep.subr.mxu0 0.0
    %121 = vmatpush2.msra.mxu0 0.0
    %122 = vmatprep.subr.mxu0 0.0
    %123 = vmatpush2.msra.mxu0 0.0
    %124 = vmatprep.subr.mxu0 0.0
    %125 = vmatpush2.msra.mxu0 0.0
    %126 = vmatprep.subr.mxu0 0.0
    %127 = vmatpush2.msra.mxu0 0.0
    %128 = vmatprep.subr.mxu0 0.0
    %129 = vmatpush2.msra.mxu0 0.0
    %130 = vmatprep.subr.mxu0 0.0
    %131 = vmatpush2.msra.mxu0 0.0
    %132 = vmatprep.subr.mxu0 0.0
    %133 = vmatpush2.msra.mxu0 0.0
    %134 = vmatprep.subr.mxu0 0.0
    %135 = vmatpush2.msra.mxu0 0.0
    %136 = vmatprep.subr.mxu0 0.0
    %137 = vmatpush2.msra.mxu0 0.0
    %138 = vmatprep.subr.mxu0 0.0
    %139 = vmatpush2.msra.mxu0 0.0
    %140 = vmatprep.subr.mxu0 0.0
    %141 = vmatpush2.msra.mxu0 0.0
    %142 = vmatprep.mubr.f32.mxu0 0.0
    %143 = vmatmul.mubr.f32.gmra.mxu0 %v73
    %v144 = vpop.f32.mrf.mxu0
    %v145 = vadd.f32 0.0, %v144
    %v146 = vpop.f32.mrf.mxu0
    %147 = vmatprep.mubr.f32.mxu0 0.0
    %148 = vmatmul.mubr.f32.gmra.mxu0 %v76
    %v149 = vpop.f32.mrf.mxu0
    %v150 = vadd.f32 0.0, %v149
    %v151 = vpop.f32.mrf.mxu0
    %152 = vdwg.mxu0
    %v153 = vld [vmem:[%s2] sm:$0xff]
    %v154 = vld [vmem:[%s2 + $0x8] sm:$0xff]
    %v155 = vld [vmem:[%s2 + $0x10] sm:$0xff]
    %v156 = vld [vmem:[%s2 + $0x18] sm:$0xff]
    %v157 = vld [vmem:[%s3] sm:$0x1]
    %v159 = vlaneseq
    %v160 = vshrl.u32 %v159, 7
    %v161 = vsub.s32 0, %v160
    %v162 = vrot.slane %v157, %v161
    %vm164 = vcmask 261120
    %v166 = vsel %vm164, %v145, 0
    %v169 = vsel %vm164, %v150, 0
    %171 = vmatprep.subr.mxu0 0.0
    %172 = vmatpush1.msra.mxu0 0.0
    %173 = vmatprep.subr.mxu0 0.0
    %174 = vmatpush1.msra.mxu0 0.0
    %175 = vmatprep.subr.mxu0 0.0
    %176 = vmatpush1.msra.mxu0 0.0
    %177 = vmatprep.subr.mxu0 0.0
    %178 = vmatpush1.msra.mxu0 0.0
    %179 = vmatprep.subr.mxu0 0.0
    %180 = vmatpush1.msra.mxu0 0.0
    %181 = vmatprep.subr.mxu0 0.0
    %182 = vmatpush1.msra.mxu0 0.0
    %183 = vmatprep.subr.mxu0 0.0
    %184 = vmatpush1.msra.mxu0 0.0
    %185 = vmatprep.subr.mxu0 0.0
    %186 = vmatpush1.msra.mxu0 0.0
    %187 = vmatprep.subr.mxu0 0.0
    %188 = vmatpush1.msra.mxu0 0.0
    %189 = vmatprep.subr.mxu0 0.0
    %190 = vmatpush1.msra.mxu0 0.0
    %191 = vmatprep.subr.mxu0 0.0
    %192 = vmatpush1.msra.mxu0 0.0
    %193 = vmatprep.subr.mxu0 0.0
    %194 = vmatpush1.msra.mxu0 0.0
    %195 = vmatprep.subr.mxu0 0.0
    %196 = vmatpush1.msra.mxu0 %v156
    %197 = vmatprep.subr.mxu0 0.0
    %198 = vmatpush1.msra.mxu0 %v155
    %199 = vmatprep.subr.mxu0 0.0
    %200 = vmatpush1.msra.mxu0 %v154
    %201 = vmatprep.subr.mxu0 0.0
    %202 = vmatpush1.msra.mxu0 %v153
    %203 = vmatprep.subr.mxu0 0.0
    %204 = vmatpush2.msra.mxu0 0.0
    %205 = vmatprep.subr.mxu0 0.0
    %206 = vmatpush2.msra.mxu0 0.0
    %207 = vmatprep.subr.mxu0 0.0
    %208 = vmatpush2.msra.mxu0 0.0
    %209 = vmatprep.subr.mxu0 0.0
    %210 = vmatpush2.msra.mxu0 0.0
    %211 = vmatprep.subr.mxu0 0.0
    %212 = vmatpush2.msra.mxu0 0.0
    %213 = vmatprep.subr.mxu0 0.0
    %214 = vmatpush2.msra.mxu0 0.0
    %215 = vmatprep.subr.mxu0 0.0
    %216 = vmatpush2.msra.mxu0 0.0
    %217 = vmatprep.subr.mxu0 0.0
    %218 = vmatpush2.msra.mxu0 0.0
    %219 = vmatprep.subr.mxu0 0.0
    %220 = vmatpush2.msra.mxu0 0.0
    %221 = vmatprep.subr.mxu0 0.0
    %222 = vmatpush2.msra.mxu0 0.0
    %223 = vmatprep.subr.mxu0 0.0
    %224 = vmatpush2.msra.mxu0 0.0
    %225 = vmatprep.subr.mxu0 0.0
    %226 = vmatpush2.msra.mxu0 0.0
    %227 = vmatprep.subr.mxu0 0.0
    %228 = vmatpush2.msra.mxu0 0.0
    %229 = vmatprep.subr.mxu0 0.0
    %230 = vmatpush2.msra.mxu0 0.0
    %231 = vmatprep.subr.mxu0 0.0
    %232 = vmatpush2.msra.mxu0 0.0
    %233 = vmatprep.subr.mxu0 0.0
    %234 = vmatpush2.msra.mxu0 0.0
    %235 = vmatprep.mubr.f32.mxu0 0.0
    %236 = vmatmul.mubr.f32.gmra.mxu0 %v166
    %v237 = vpop.f32.mrf.mxu0
    %v238 = vadd.f32 %v162, %v237
    %v239 = vpop.f32.mrf.mxu0
    %240 = vmatprep.mubr.f32.mxu0 0.0
    %241 = vmatmul.mubr.f32.gmra.mxu0 %v169
    %v242 = vpop.f32.mrf.mxu0
    %v243 = vadd.f32 %v162, %v242
    %v244 = vpop.f32.mrf.mxu0
    %245 = vdwg.mxu0
    %v246 = vmax.f32 %v238, 0.0
    %v247 = vmax.f32 %v243, 0.0
    %v248 = vld [vmem:[%s4] sm:$0xff]
    %v249 = vld [vmem:[%s4 + $0x8] sm:$0xff]
    %v250 = vld [vmem:[%s4 + $0x10] sm:$0xff]
    %v251 = vld [vmem:[%s4 + $0x18] sm:$0xff]
    %v252 = vld [vmem:[%s5] sm:$0x1]
    %v254 = vlaneseq
    %v255 = vshrl.u32 %v254, 7
    %v256 = vsub.s32 0, %v255
    %v257 = vrot.slane %v252, %v256
    %v260 = vsel %vm164, %v246, 0
    %v263 = vsel %vm164, %v247, 0
    %265 = vmatprep.subr.mxu0 0.0
    %266 = vmatpush1.msra.mxu0 0.0
    %267 = vmatprep.subr.mxu0 0.0
    %268 = vmatpush1.msra.mxu0 0.0
    %269 = vmatprep.subr.mxu0 0.0
    %270 = vmatpush1.msra.mxu0 0.0
    %271 = vmatprep.subr.mxu0 0.0
    %272 = vmatpush1.msra.mxu0 0.0
    %273 = vmatprep.subr.mxu0 0.0
    %274 = vmatpush1.msra.mxu0 0.0
    %275 = vmatprep.subr.mxu0 0.0
    %276 = vmatpush1.msra.mxu0 0.0
    %277 = vmatprep.subr.mxu0 0.0
    %278 = vmatpush1.msra.mxu0 0.0
    %279 = vmatprep.subr.mxu0 0.0
    %280 = vmatpush1.msra.mxu0 0.0
    %281 = vmatprep.subr.mxu0 0.0
    %282 = vmatpush1.msra.mxu0 0.0
    %283 = vmatprep.subr.mxu0 0.0
    %284 = vmatpush1.msra.mxu0 0.0
    %285 = vmatprep.subr.mxu0 0.0
    %286 = vmatpush1.msra.mxu0 0.0
    %287 = vmatprep.subr.mxu0 0.0
    %288 = vmatpush1.msra.mxu0 0.0
    %289 = vmatprep.subr.mxu0 0.0
    %290 = vmatpush1.msra.mxu0 %v251
    %291 = vmatprep.subr.mxu0 0.0
    %292 = vmatpush1.msra.mxu0 %v250
    %293 = vmatprep.subr.mxu0 0.0
    %294 = vmatpush1.msra.mxu0 %v249
    %295 = vmatprep.subr.mxu0 0.0
    %296 = vmatpush1.msra.mxu0 %v248
    %297 = vmatprep.subr.mxu0 0.0
    %298 = vmatpush2.msra.mxu0 0.0
    %299 = vmatprep.subr.mxu0 0.0
    %300 = vmatpush2.msra.mxu0 0.0
    %301 = vmatprep.subr.mxu0 0.0
    %302 = vmatpush2.msra.mxu0 0.0
    %303 = vmatprep.subr.mxu0 0.0
    %304 = vmatpush2.msra.mxu0 0.0
    %305 = vmatprep.subr.mxu0 0.0
    %306 = vmatpush2.msra.mxu0 0.0
    %307 = vmatprep.subr.mxu0 0.0
    %308 = vmatpush2.msra.mxu0 0.0
    %309 = vmatprep.subr.mxu0 0.0
    %310 = vmatpush2.msra.mxu0 0.0
    %311 = vmatprep.subr.mxu0 0.0
    %312 = vmatpush2.msra.mxu0 0.0
    %313 = vmatprep.subr.mxu0 0.0
    %314 = vmatpush2.msra.mxu0 0.0
    %315 = vmatprep.subr.mxu0 0.0
    %316 = vmatpush2.msra.mxu0 0.0
    %317 = vmatprep.subr.mxu0 0.0
    %318 = vmatpush2.msra.mxu0 0.0
    %319 = vmatprep.subr.mxu0 0.0
    %320 = vmatpush2.msra.mxu0 0.0
    %321 = vmatprep.subr.mxu0 0.0
    %322 = vmatpush2.msra.mxu0 0.0
    %323 = vmatprep.subr.mxu0 0.0
    %324 = vmatpush2.msra.mxu0 0.0
    %325 = vmatprep.subr.mxu0 0.0
    %326 = vmatpush2.msra.mxu0 0.0
    %327 = vmatprep.subr.mxu0 0.0
    %328 = vmatpush2.msra.mxu0 0.0
    %329 = vmatprep.mubr.f32.mxu0 0.0
    %330 = vmatmul.mubr.f32.gmra.mxu0 %v260
    %v331 = vpop.f32.mrf.mxu0
    %v332 = vadd.f32 %v257, %v331
    %v333 = vpop.f32.mrf.mxu0
    %334 = vmatprep.mubr.f32.mxu0 0.0
    %335 = vmatmul.mubr.f32.gmra.mxu0 %v263
    %v336 = vpop.f32.mrf.mxu0
    %v337 = vadd.f32 %v257, %v336
    %v338 = vpop.f32.mrf.mxu0
    %339 = vdwg.mxu0
    %340 = vst.msk [vmem:[#allocation6] sm:$0xff] %vm71, %v332
    %341 = vst.msk [vmem:[#allocation6 + $0x8] sm:$0xff] %vm71, %v337
    %v342 = vld [vmem:[#allocation3] sm:$0xff]
    %v343 = vld [vmem:[#allocation3 + $0x8] sm:$0xff]
    %v344 = vld [vmem:[#allocation2] sm:$0x1]
    %v345 = vsel %vm71, %v342, 0.0
    %346 = vadd.xlane.f32.xlu0 %v345
    %v347 = vpop.xlane.xlu0 %346
    %v348 = vsel %vm71, %v343, 0.0
    %349 = vadd.xlane.f32.xlu0 %v348
    %v350 = vpop.xlane.xlu0 %349
    %v351 = vsub.f32 %v347, 1.0
    %v352 = vsub.f32 %v350, 1.0
    %v354 = vlaneseq
    %v355 = vshrl.u32 %v354, 7
    %v356 = vsub.s32 0, %v355
    %v357 = vrot.slane %v344, %v356
    %v359 = vmul.f32 %v357, %v351
    %v360 = vmul.f32 %v357, %v352
    %362 = vset.pattern.permute.xlu0 0
    %363 = vperm.xlu0 %362, %v359
    %v364 = vpop.permute.xlu0 %363
    %367 = vset.pattern.permute.xlu0 0
    %368 = vperm.xlu0 %367, %v360
    %v369 = vpop.permute.xlu0 %368
    %v372 = vsel %vm71, %v342, 0
    %v375 = vsel %vm71, %v343, 0
    %377 = vmatprep.subr.mxu0 0.0
    %378 = vmatpush1.msra.mxu0 0.0
    %379 = vmatprep.subr.mxu0 0.0
    %380 = vmatpush1.msra.mxu0 0.0
    %381 = vmatprep.subr.mxu0 0.0
    %382 = vmatpush1.msra.mxu0 0.0
    %383 = vmatprep.subr.mxu0 0.0
    %384 = vmatpush1.msra.mxu0 0.0
    %385 = vmatprep.subr.mxu0 0.0
    %386 = vmatpush1.msra.mxu0 0.0
    %387 = vmatprep.subr.mxu0 0.0
    %388 = vmatpush1.msra.mxu0 0.0
    %389 = vmatprep.subr.mxu0 0.0
    %390 = vmatpush1.msra.mxu0 0.0
    %391 = vmatprep.subr.mxu0 0.0
    %392 = vmatpush1.msra.mxu0 0.0
    %393 = vmatprep.subr.mxu0 0.0
    %394 = vmatpush1.msra.mxu0 0.0
    %395 = vmatprep.subr.mxu0 0.0
    %396 = vmatpush1.msra.mxu0 0.0
    %397 = vmatprep.subr.mxu0 0.0
    %398 = vmatpush1.msra.mxu0 0.0
    %399 = vmatprep.subr.mxu0 0.0
    %400 = vmatpush1.msra.mxu0 0.0
    %401 = vmatprep.subr.mxu0 0.0
    %402 = vmatpush1.msra.mxu0 0.0
    %403 = vmatprep.subr.mxu0 0.0
    %404 = vmatpush1.msra.mxu0 0.0
    %405 = vmatprep.subr.mxu0 0.0
    %406 = vmatpush1.msra.mxu0 %v337
    %407 = vmatprep.subr.mxu0 0.0
    %408 = vmatpush1.msra.mxu0 %v332
    %409 = vmatprep.subr.mxu0 0.0
    %410 = vmatpush2.msra.mxu0 0.0
    %411 = vmatprep.subr.mxu0 0.0
    %412 = vmatpush2.msra.mxu0 0.0
    %413 = vmatprep.subr.mxu0 0.0
    %414 = vmatpush2.msra.mxu0 0.0
    %415 = vmatprep.subr.mxu0 0.0
    %416 = vmatpush2.msra.mxu0 0.0
    %417 = vmatprep.subr.mxu0 0.0
    %418 = vmatpush2.msra.mxu0 0.0
    %419 = vmatprep.subr.mxu0 0.0
    %420 = vmatpush2.msra.mxu0 0.0
    %421 = vmatprep.subr.mxu0 0.0
    %422 = vmatpush2.msra.mxu0 0.0
    %423 = vmatprep.subr.mxu0 0.0
    %424 = vmatpush2.msra.mxu0 0.0
    %425 = vmatprep.subr.mxu0 0.0
    %426 = vmatpush2.msra.mxu0 0.0
    %427 = vmatprep.subr.mxu0 0.0
    %428 = vmatpush2.msra.mxu0 0.0
    %429 = vmatprep.subr.mxu0 0.0
    %430 = vmatpush2.msra.mxu0 0.0
    %431 = vmatprep.subr.mxu0 0.0
    %432 = vmatpush2.msra.mxu0 0.0
    %433 = vmatprep.subr.mxu0 0.0
    %434 = vmatpush2.msra.mxu0 0.0
    %435 = vmatprep.subr.mxu0 0.0
    %436 = vmatpush2.msra.mxu0 0.0
    %437 = vmatprep.subr.mxu0 0.0
    %438 = vmatpush2.msra.mxu0 0.0
    %439 = vmatprep.subr.mxu0 0.0
    %440 = vmatpush2.msra.mxu0 0.0
    %441 = vmatprep.mubr.f32.mxu0 0.0
    %442 = vmatmul.mubr.f32.gmra.mxu0 %v372
    %v443 = vpop.f32.mrf.mxu0
    %v444 = vadd.f32 %v364, %v443
    %v445 = vpop.f32.mrf.mxu0
    %446 = vmatprep.mubr.f32.mxu0 0.0
    %447 = vmatmul.mubr.f32.gmra.mxu0 %v375
    %v448 = vpop.f32.mrf.mxu0
    %v449 = vadd.f32 %v369, %v448
    %v450 = vpop.f32.mrf.mxu0
    %451 = vdwg.mxu0
    %v452 = vsel %vm71, %v444, -inf
    %453 = vmax.xlane.f32.xlu0 %v452
    %v454 = vpop.xlane.xlu0 %453
    %v455 = vsel %vm71, %v449, -inf
    %456 = vmax.xlane.f32.xlu0 %v455
    %v457 = vpop.xlane.xlu0 %456
    %v458 = vsub.f32 %v444, %v454
    %v459 = vsub.f32 %v449, %v457
    %v460 = vmul.f32 %v458, 1.442695
    %v461 = vpow.pop %v460
    %v462 = vmul.f32 %v459, 1.442695
    %v463 = vpow.pop %v462
    %v464 = vsel %vm71, %v461, 0.0
    %465 = vadd.xlane.f32.xlu0 %v464
    %v466 = vpop.xlane.xlu0 %465
    %v467 = vsel %vm71, %v463, 0.0
    %468 = vadd.xlane.f32.xlu0 %v467
    %v469 = vpop.xlane.xlu0 %468
    %v470 = vrcp.pop %v466
    %v471 = vmul.f32 %v461, %v470
    %v472 = vrcp.pop %v469
    %v473 = vmul.f32 %v463, %v472
    %474 = vst.msk [vmem:[#allocation7] sm:$0xff] %vm71, %v471
    %475 = vst.msk [vmem:[#allocation7 + $0x8] sm:$0xff] %vm71, %v473
    %v476 = vld [vmem:[%s8] sm:$0xff]
    %v477 = vsel %vm71, %v476, -inf
    %478 = vmax.xlane.f32.xlu0 %v477
    %v479 = vpop.xlane.xlu0 %478
    %v480 = vsub.f32 %v476, %v479
    %v481 = vmul.f32 %v480, 1.442695
    %v482 = vpow.pop %v481
    %v483 = vsel %vm71, %v482, 0.0
    %484 = vadd.xlane.f32.xlu0 %v483
    %v485 = vpop.xlane.xlu0 %484
    %v486 = vrcp.pop %v485
    %v487 = vmul.f32 %v482, %v486
    %488 = vst.msk [vmem:[#allocation9] sm:$0xff] %vm71, %v487
    // Predicated region
    $region42: #{tpu_custom_call.1} parent=1 // pred_check
      _
    $region43: #{tpu_custom_call.1} parent=1 // pred_check_branch
      %490 = sbr.rel (0) target = $region45
    $region44: #{tpu_custom_call.1} parent=1 // pred_region
      %s492 = ssub.s32 256, 256
      %493 = vsyncadd [#allocation5], %s492
      %s494 = sshll.u32 [#allocation6], 4
      %s495 = int_to_ptr.vmem [resolvable:$true] %s494
      %500 = dma.vmem_to_hbm [thread:$0]  %s495, 256, %s9, [#allocation5], 128, 128, 8
    $region45: #{tpu_custom_call.1} parent=1 // pred_fallthru
      _
    // Predicated region
    $region46: #{tpu_custom_call.1} parent=1 // pred_check
      _
    $region47: #{tpu_custom_call.1} parent=1 // pred_check_branch
      %502 = sbr.rel (0) target = $region49
    $region48: #{tpu_custom_call.1} parent=1 // pred_region
      %s504 = ssub.s32 256, 256
      %505 = vsyncadd [#allocation8], %s504
      %s506 = sshll.u32 [#allocation7], 4
      %s507 = int_to_ptr.vmem [resolvable:$true] %s506
      %512 = dma.vmem_to_hbm [thread:$0]  %s507, 256, %s10, [#allocation8], 128, 128, 8
    $region49: #{tpu_custom_call.1} parent=1 // pred_fallthru
      _
    // Predicated region
    $region50: #{tpu_custom_call.1} parent=1 // pred_check
      _
    $region51: #{tpu_custom_call.1} parent=1 // pred_check_branch
      %514 = sbr.rel (0) target = $region53
    $region52: #{tpu_custom_call.1} parent=1 // pred_region
      %s516 = ssub.s32 128, 128
      %517 = vsyncadd [#allocation8], %s516
      %s519 = sshll.u32 [#allocation9], 4
      %s520 = int_to_ptr.vmem [resolvable:$true] %s519
      %522 = dma.vmem_to_hbm [thread:$0]  %s520, 128, %s11, [#allocation8]
    $region53: #{tpu_custom_call.1} parent=1 // pred_fallthru
      _
    // Predicated region
    $region54: #{tpu_custom_call.1} parent=1 // pred_check
      _
    $region55: #{tpu_custom_call.1} parent=1 // pred_check_branch
      %524 = sbr.rel (0) target = $region57
    $region56: #{tpu_custom_call.1} parent=1 // pred_region
      %525 = dma.done [#allocation5], 256
    $region57: #{tpu_custom_call.1} parent=1 // pred_fallthru
      _
    // Predicated region
    $region58: #{tpu_custom_call.1} parent=1 // pred_check
      _
    $region59: #{tpu_custom_call.1} parent=1 // pred_check_branch
      %527 = sbr.rel (0) target = $region61
    $region60: #{tpu_custom_call.1} parent=1 // pred_region
      %528 = dma.done [#allocation8], 256
    $region61: #{tpu_custom_call.1} parent=1 // pred_fallthru
      _
    // Predicated region
    $region62: #{tpu_custom_call.1} parent=1 // pred_check
      _
    $region63: #{tpu_custom_call.1} parent=1 // pred_check_branch
      %530 = sbr.rel (0) target = $region65
    $region64: #{tpu_custom_call.1} parent=1 // pred_region
      %531 = dma.done [#allocation8], 128
    $region65: #{tpu_custom_call.1} parent=1 // pred_fallthru
      _
    %532 = vsyncpa [#allocation4], 1
    %533 = vsyncpa [#allocation5], 1
    %534 = vsyncpa [#allocation8], 1

</llo_original>
